<compile_context>
chip_gen: v6e
topology: v6e:2x2x1
jax: 0.10.0
libtpu: 0.0.40
codegen_flags: <defaults>
</compile_context>

<pallas_src>
import math
import functools

import numpy as np
import jax
import jax.numpy as jnp
from jax import lax
from jax.experimental import pallas as pl
from jax.experimental.pallas import tpu as pltpu


def _ref_norm_kernel(x_ref, s_ref, o_ref, *, squared):
    # x_ref: (TB, D_total*C)  batch rows x flattened (irrep, channel)
    # s_ref: (D_total*C, K*C) constant selection / scale matrix (resident)
    # o_ref: (TB, K*C)
    x = x_ref[...].astype(jnp.float32)
    # Whole per-irrep sum-of-squares (scale folded into S) as one MXU dot.
    # f32 x f32 matmul is full precision on the TPU MXU.
    val = jnp.dot(x * x, s_ref[...], preferred_element_type=jnp.float32)
    if not squared:
        # Scale was folded *inside* the sqrt: sqrt(sum/d) == sqrt(sum)/sqrt(d).
        val = jnp.sqrt(val)
    o_ref[...] = val.astype(o_ref.dtype)


def _build_selection_matrix(irrep_dims, C, scaled):
    """S[d_idx*C + c, k*C + c] = w_k for d_idx inside irrep k, else 0.

    w_k = 1/dim_k when scaled else 1.0; dim_k == 0 irreps contribute nothing,
    so their output columns are exactly 0 (matches rsqrt_dim_val = 0.0).
    """
    D_total = sum(irrep_dims)
    K = len(irrep_dims)
    sel = np.zeros((D_total, K), np.float32)
    off = 0
    for k, d in enumerate(irrep_dims):
        if d > 0:
            sel[off:off + d, k] = (1.0 / d) if scaled else 1.0
        off += d
    # Expand with a channel identity: kron gives [(d_idx, c), (k, c')] layout.
    s = np.kron(sel, np.eye(C, dtype=np.float32))
    return jnp.asarray(s, jnp.float32)


def _choose_batch_tile(B, Din, Dout, in_itemsize, out_itemsize, s_bytes,
                       vmem_budget_bytes=24 * 1024 * 1024, target_grid=4):
    """Pick the batch tile (rows per grid step).

    Aims for >= target_grid grid steps (v7x has 2 TensorCores; >= 2 steps/core
    gives parallelism + DMA/compute overlap) while keeping the double-buffered
    in/out blocks plus the resident S matrix within a budget that fits every
    generation's scoped VMEM.
    """
    if B <= 8:
        return B  # single block; block dim equals full array dim (legal)
    per_row = 2 * Din * in_itemsize + 2 * Dout * out_itemsize  # double-buffered
    cap = max((vmem_budget_bytes - 2 * s_bytes) // per_row, 8)
    want = max(pl.cdiv(B, target_grid), 8)
    tb = max(8, (min(cap, want) // 8) * 8)  # multiple of 8 (sublane tile)
    return int(tb)


def ref_norm(x, irrep_dims, *, scaled=True, squared=False, keepdim=True):
    """Pallas implementation of RefNorm.forward.

    x:        [B, D_total, C] with D_total == sum(irrep_dims)
    returns:  [B, K, C] if keepdim else [B, K*C]
    """
    B, D_total, C = x.shape
    irrep_dims = tuple(int(d) for d in irrep_dims)
    assert D_total == sum(irrep_dims), "irrep dims must tile axis -2"
    assert D_total > 0, "need at least one nonzero irrep dim"
    K = len(irrep_dims)

    Din = D_total * C   # flattened (irrep, channel) input width
    Dout = K * C        # flattened (irrep, channel) output width

    # Free trailing-dim collapse (contiguous) -- no HBM transpose/copy.
    xf = x.reshape(B, Din)

    s = _build_selection_matrix(irrep_dims, C, scaled)
    s_bytes = int(s.size) * 4
    # TODO(synk): block the reduction over Din (K-style grid axis + accumulator)
    # if the selection matrix ever exceeds the VMEM budget for huge irrep stacks.
    assert s_bytes <= 16 * 1024 * 1024, "selection matrix too large for VMEM"

    tb = _choose_batch_tile(B, Din, Dout, x.dtype.itemsize, x.dtype.itemsize,
                            s_bytes)
    grid = pl.cdiv(B, tb)

    kern = functools.partial(_ref_norm_kernel, squared=squared)

    out = pl.pallas_call(
        kern,
        out_shape=jax.ShapeDtypeStruct((B, Dout), x.dtype),
        grid_spec=pltpu.PrefetchScalarGridSpec(
            num_scalar_prefetch=0,
            grid=(grid,),
            in_specs=[
                pl.BlockSpec((tb, Din), lambda i: (i, 0)),
                # Same block every step -> fetched once, stays resident.
                pl.BlockSpec((Din, Dout), lambda i: (0, 0)),
            ],
            out_specs=pl.BlockSpec((tb, Dout), lambda i: (i, 0)),
        ),
        compiler_params=pltpu.CompilerParams(
            dimension_semantics=("parallel",),
            vmem_limit_bytes=32 * 1024 * 1024,
        ),
    )(xf, s)

    if keepdim:
        return out.reshape(B, K, C)
    # Separable(cat_after=True) with keepdim=False: irrep-major cat on dim -1.
    return out


def _reference(x, irrep_dims, scaled, squared, keepdim):
    """Pure-JAX reference mirroring the PyTorch module semantics."""
    B, _, C = x.shape
    refs = []
    off = 0
    for d in irrep_dims:
        seg = x[:, off:off + d, :]
        v = jnp.sum(seg * seg, axis=-2, keepdims=True)
        if not squared:
            v = jnp.sqrt(v)
        if scaled:
            s = ((1.0 / d) if squared else (1.0 / math.sqrt(d))) if d > 0 else 0.0
            v = v * s
        refs.append(v)
        off += d
    ref = jnp.concatenate(refs, axis=-2)
    if not keepdim:
        ref = ref.reshape(B, len(irrep_dims) * C)
    return ref


if __name__ == "__main__":
    key = jax.random.PRNGKey(0)

    configs = [
        # (irrep_dims, B, C)
        ((1, 3, 5), 4, 32),       # "0e + 1e + 2e", single-block path
        ((2, 0, 3, 5), 20, 32),   # zero-dim irrep + tiled grid w/ ragged last block
    ]

    for irrep_dims, B, C in configs:
        D_total = sum(irrep_dims)
        key, sub = jax.random.split(key)
        x = jax.random.normal(sub, (B, D_total, C), dtype=jnp.float32)

        for scaled, squared, keepdim in [(True, False, True),
                                         (True, True, False),
                                         (False, False, True),
                                         (False, True, False)]:
            out = ref_norm(x, irrep_dims, scaled=scaled, squared=squared,
                           keepdim=keepdim)
            out = jax.block_until_ready(out)
            ref = _reference(x, irrep_dims, scaled, squared, keepdim)
            assert out.shape == ref.shape, (out.shape, ref.shape)
            assert jnp.allclose(out, ref, atol=1e-5, rtol=1e-5), (
                "mismatch vs reference", irrep_dims, B, C, scaled, squared,
                keepdim)

    print("KERNEL_OK")
</pallas_src>

<mosaic_0001>
module attributes {stable_mosaic.version = 11 : i64} {
  func.func @_ref_norm_kernel(%arg0: i32, %arg1: memref<4x288xf32, #tpu.memory_space<vmem>>, %arg2: memref<288x96xf32, #tpu.memory_space<vmem>>, %arg3: memref<4x96xf32, #tpu.memory_space<vmem>>) attributes {dimension_semantics = [#tpu.dimension_semantics<parallel>], iteration_bounds = array<i64: 1>, scalar_prefetch = 0 : i64, scratch_operands = 0 : i64, tpu.core_type = #tpu.core_type<tc>, window_params = [{transform_indices = @transform_0, window_bounds = array<i64: 4, 288>}, {pipeline_mode = #tpu.pipeline_mode<synchronous>, transform_indices = @transform_1, window_bounds = array<i64: 288, 96>}, {transform_indices = @transform_2, window_bounds = array<i64: 4, 96>}]} {
    %c0 = arith.constant 0 : index
    %c0_0 = arith.constant 0 : index
    %0 = vector.load %arg1[%c0, %c0_0] : memref<4x288xf32, #tpu.memory_space<vmem>>, vector<4x288xf32>
    %1 = arith.mulf %0, %0 : vector<4x288xf32>
    %c0_1 = arith.constant 0 : index
    %c0_2 = arith.constant 0 : index
    %2 = vector.load %arg2[%c0_1, %c0_2] : memref<288x96xf32, #tpu.memory_space<vmem>>, vector<288x96xf32>
    %cst = arith.constant dense<0.000000e+00> : vector<4x96xf32>
    %3 = tpu.matmul %1, %2, %cst {dimension_numbers = #tpu.dot_dimension_numbers<[1], [0], [0], [1], [0, 0, 1, 1], [], []>} : vector<4x288xf32>, vector<288x96xf32>, vector<4x96xf32> -> vector<4x96xf32>
    %4 = math.sqrt %3 : vector<4x96xf32>
    %c0_3 = arith.constant 0 : index
    %c0_4 = arith.constant 0 : index
    %5 = vector.load %arg3[%c0_3, %c0_4] : memref<4x96xf32, #tpu.memory_space<vmem>>, vector<4x96xf32>
    tpu.vector_store %arg3[%c0_3, %c0_4], %4 {strides = array<i32>} : memref<4x96xf32, #tpu.memory_space<vmem>>, vector<4x96xf32>,
    return
  }
  func.func @transform_0(%arg0: i32) -> (i32, i32) {
    %c0_i32 = arith.constant 0 : i32
    %c0_i32_0 = arith.constant 0 : i32
    return %arg0, %c0_i32 : i32, i32
  }
  func.func @transform_1(%arg0: i32) -> (i32, i32) {
    %c0_i32 = arith.constant 0 : i32
    %c0_i32_0 = arith.constant 0 : i32
    %c0_i32_1 = arith.constant 0 : i32
    return %c0_i32, %c0_i32_0 : i32, i32
  }
  func.func @transform_2(%arg0: i32) -> (i32, i32) {
    %c0_i32 = arith.constant 0 : i32
    %c0_i32_0 = arith.constant 0 : i32
    return %arg0, %c0_i32 : i32, i32
  }
}

</mosaic_0001>

<llo_original>
// kernel: tpu_custom_call.1
$region0: #{tpu_custom_call.1}
  #allocation0 [shape = 'u32[]', space=smem, size = 0x4, offset = 0x4, fixed_abs, tag = 'smem constant byte address 0x4 - core index']
  #allocation1 [shape = 'u32[144,128]{1,0:T(1,128)}', space=vmem, size = 0x12000, scoped, tag = 'internal scratch']
  %s0 = inlined_call_operand.hbm [shape: f32[4,288], index: 0, kind: input, shape index: {}]
  %s1 = inlined_call_operand.hbm [shape: f32[288,96], index: 1, kind: input, shape index: {}]
  %s2 = inlined_call_operand.hbm [shape: f32[4,96], index: 2, kind: output, shape index: {}]
  %s3 = sld [smem:[#allocation0]]
  $region26: #{tpu_custom_call.1} parent=0
    _
  %s5 = ssub.s32 1, %s3
  %s6 = scalar_select 0, %s5, %s3
  $region1: #{tpu_custom_call.1} parent=0
    #allocation2 [shape = 'u8[6144]{0}', space=vmem, size = 0x1800, scoped, tag = 'input window, operand 0, single buffered']
    #allocation3 [shape = 's32[1]{0}', space=sflag, size = 0x4, scoped, tag = 'scoped memory for tpu_custom_call.1']
    #allocation4 [shape = 's32[1]{0}', space=sflag, size = 0x4, scoped, tag = 'scoped memory for tpu_custom_call.1']
    #allocation5 [shape = 'u8[147456]{0}', space=vmem, size = 0x24000, scoped, tag = 'input window, operand 1, single buffered']
    #allocation6 [shape = 's32[1]{0}', space=sflag, size = 0x4, scoped, tag = 'scoped memory for tpu_custom_call.1']
    #allocation7 [shape = 'u8[2048]{0}', space=vmem, size = 0x800, scoped, tag = 'output window, operand 0, single buffered']
    %7 = vsyncpa [#allocation3], 0
    %8 = vsyncpa [#allocation6], 0
    %9 = vsyncpa [#allocation4], 0
    // Predicated region
    $region2: #{tpu_custom_call.1} parent=1 // pred_check
      _
    $region3: #{tpu_custom_call.1} parent=1 // pred_check_branch
      %11 = sbr.rel (0) target = $region5
    $region4: #{tpu_custom_call.1} parent=1 // pred_region
      %s13 = ssub.s32 192, 192
      %14 = vsyncadd [#allocation3], %s13
      %s16 = sshll.u32 [#allocation2], 4
      %s17 = int_to_ptr.vmem [resolvable:$true] %s16
      %19 = dma.hbm_to_vmem [thread:$0]  %s0, 192, %s17, [#allocation3]
    $region5: #{tpu_custom_call.1} parent=1 // pred_fallthru
      _
    // Predicated region
    $region6: #{tpu_custom_call.1} parent=1 // pred_check
      _
    $region7: #{tpu_custom_call.1} parent=1 // pred_check_branch
      %21 = sbr.rel (0) target = $region9
    $region8: #{tpu_custom_call.1} parent=1 // pred_region
      %s23 = ssub.s32 4608, 4608
      %24 = vsyncadd [#allocation6], %s23
      %s25 = sshll.u32 [#allocation5], 4
      %s26 = int_to_ptr.vmem [resolvable:$true] %s25
      %31 = dma.hbm_to_vmem [thread:$0]  %s1, 4608, %s26, [#allocation6], 128, 128, 8
    $region9: #{tpu_custom_call.1} parent=1 // pred_fallthru
      _
    // Predicated region
    $region10: #{tpu_custom_call.1} parent=1 // pred_check
      _
    $region11: #{tpu_custom_call.1} parent=1 // pred_check_branch
      %33 = sbr.rel (0) target = $region13
    $region12: #{tpu_custom_call.1} parent=1 // pred_region
      %34 = dma.done [#allocation3], 192
    $region13: #{tpu_custom_call.1} parent=1 // pred_fallthru
      _
    // Predicated region
    $region14: #{tpu_custom_call.1} parent=1 // pred_check
      _
    $region15: #{tpu_custom_call.1} parent=1 // pred_check_branch
      %36 = sbr.rel (0) target = $region17
    $region16: #{tpu_custom_call.1} parent=1 // pred_region
      %37 = dma.done [#allocation6], 4608
    $region17: #{tpu_custom_call.1} parent=1 // pred_fallthru
      _
    %v38 = vld [vmem:[#allocation2] sm:$0xff]
    %v39 = vld [vmem:[#allocation2 + $0x8] sm:$0xf]
    %v40 = vmul.f32 %v38, %v38
    %v41 = vmul.f32 %v39, %v39
    %v42 = vld [vmem:[#allocation5] sm:$0xff]
    %v43 = vld [vmem:[#allocation5 + $0x8] sm:$0xff]
    %v44 = vld [vmem:[#allocation5 + $0x10] sm:$0xff]
    %v45 = vld [vmem:[#allocation5 + $0x18] sm:$0xff]
    %v46 = vld [vmem:[#allocation5 + $0x20] sm:$0xff]
    %v47 = vld [vmem:[#allocation5 + $0x28] sm:$0xff]
    %v48 = vld [vmem:[#allocation5 + $0x30] sm:$0xff]
    %v49 = vld [vmem:[#allocation5 + $0x38] sm:$0xff]
    %v50 = vld [vmem:[#allocation5 + $0x40] sm:$0xff]
    %v51 = vld [vmem:[#allocation5 + $0x48] sm:$0xff]
    %v52 = vld [vmem:[#allocation5 + $0x50] sm:$0xff]
    %v53 = vld [vmem:[#allocation5 + $0x58] sm:$0xff]
    %v54 = vld [vmem:[#allocation5 + $0x60] sm:$0xff]
    %v55 = vld [vmem:[#allocation5 + $0x68] sm:$0xff]
    %v56 = vld [vmem:[#allocation5 + $0x70] sm:$0xff]
    %v57 = vld [vmem:[#allocation5 + $0x78] sm:$0xff]
    %v58 = vld [vmem:[#allocation5 + $0x80] sm:$0xff]
    %v59 = vld [vmem:[#allocation5 + $0x88] sm:$0xff]
    %v60 = vld [vmem:[#allocation5 + $0x90] sm:$0xff]
    %v61 = vld [vmem:[#allocation5 + $0x98] sm:$0xff]
    %v62 = vld [vmem:[#allocation5 + $0xa0] sm:$0xff]
    %v63 = vld [vmem:[#allocation5 + $0xa8] sm:$0xff]
    %v64 = vld [vmem:[#allocation5 + $0xb0] sm:$0xff]
    %v65 = vld [vmem:[#allocation5 + $0xb8] sm:$0xff]
    %v66 = vld [vmem:[#allocation5 + $0xc0] sm:$0xff]
    %v67 = vld [vmem:[#allocation5 + $0xc8] sm:$0xff]
    %v68 = vld [vmem:[#allocation5 + $0xd0] sm:$0xff]
    %v69 = vld [vmem:[#allocation5 + $0xd8] sm:$0xff]
    %v70 = vld [vmem:[#allocation5 + $0xe0] sm:$0xff]
    %v71 = vld [vmem:[#allocation5 + $0xe8] sm:$0xff]
    %v72 = vld [vmem:[#allocation5 + $0xf0] sm:$0xff]
    %v73 = vld [vmem:[#allocation5 + $0xf8] sm:$0xff]
    %v74 = vld [vmem:[#allocation5 + $0x100] sm:$0xff]
    %v75 = vld [vmem:[#allocation5 + $0x108] sm:$0xff]
    %v76 = vld [vmem:[#allocation5 + $0x110] sm:$0xff]
    %v77 = vld [vmem:[#allocation5 + $0x118] sm:$0xff]
    %v80 = vcombine.high %v40, %v40
    %vm82 = vcmask 261120
    %v83 = vsel %vm82, %v41, 0
    %85 = vmatprep.subr.mxu0 0.0
    %86 = vmatpush1.msra.mxu0 %v57
    %87 = vmatprep.subr.mxu0 0.0
    %88 = vmatpush1.msra.mxu0 %v56
    %89 = vmatprep.subr.mxu0 0.0
    %90 = vmatpush1.msra.mxu0 %v55
    %91 = vmatprep.subr.mxu0 0.0
    %92 = vmatpush1.msra.mxu0 %v54
    %93 = vmatprep.subr.mxu0 0.0
    %94 = vmatpush1.msra.mxu0 %v53
    %95 = vmatprep.subr.mxu0 0.0
    %96 = vmatpush1.msra.mxu0 %v52
    %97 = vmatprep.subr.mxu0 0.0
    %98 = vmatpush1.msra.mxu0 %v51
    %99 = vmatprep.subr.mxu0 0.0
    %100 = vmatpush1.msra.mxu0 %v50
    %101 = vmatprep.subr.mxu0 0.0
    %102 = vmatpush1.msra.mxu0 %v49
    %103 = vmatprep.subr.mxu0 0.0
    %104 = vmatpush1.msra.mxu0 %v48
    %105 = vmatprep.subr.mxu0 0.0
    %106 = vmatpush1.msra.mxu0 %v47
    %107 = vmatprep.subr.mxu0 0.0
    %108 = vmatpush1.msra.mxu0 %v46
    %109 = vmatprep.subr.mxu0 0.0
    %110 = vmatpush1.msra.mxu0 %v45
    %111 = vmatprep.subr.mxu0 0.0
    %112 = vmatpush1.msra.mxu0 %v44
    %113 = vmatprep.subr.mxu0 0.0
    %114 = vmatpush1.msra.mxu0 %v43
    %115 = vmatprep.subr.mxu0 0.0
    %116 = vmatpush1.msra.mxu0 %v42
    %117 = vmatprep.subr.mxu0 0.0
    %118 = vmatpush2.msra.mxu0 %v73
    %119 = vmatprep.subr.mxu0 0.0
    %120 = vmatpush2.msra.mxu0 %v72
    %121 = vmatprep.subr.mxu0 0.0
    %122 = vmatpush2.msra.mxu0 %v71
    %123 = vmatprep.subr.mxu0 0.0
    %124 = vmatpush2.msra.mxu0 %v70
    %125 = vmatprep.subr.mxu0 0.0
    %126 = vmatpush2.msra.mxu0 %v69
    %127 = vmatprep.subr.mxu0 0.0
    %128 = vmatpush2.msra.mxu0 %v68
    %129 = vmatprep.subr.mxu0 0.0
    %130 = vmatpush2.msra.mxu0 %v67
    %131 = vmatprep.subr.mxu0 0.0
    %132 = vmatpush2.msra.mxu0 %v66
    %133 = vmatprep.subr.mxu0 0.0
    %134 = vmatpush2.msra.mxu0 %v65
    %135 = vmatprep.subr.mxu0 0.0
    %136 = vmatpush2.msra.mxu0 %v64
    %137 = vmatprep.subr.mxu0 0.0
    %138 = vmatpush2.msra.mxu0 %v63
    %139 = vmatprep.subr.mxu0 0.0
    %140 = vmatpush2.msra.mxu0 %v62
    %141 = vmatprep.subr.mxu0 0.0
    %142 = vmatpush2.msra.mxu0 %v61
    %143 = vmatprep.subr.mxu0 0.0
    %144 = vmatpush2.msra.mxu0 %v60
    %145 = vmatprep.subr.mxu0 0.0
    %146 = vmatpush2.msra.mxu0 %v59
    %147 = vmatprep.subr.mxu0 0.0
    %148 = vmatpush2.msra.mxu0 %v58
    %149 = vmatprep.mubr.f32.mxu0 %v80
    %150 = vmatmul.mubr.f32.gmra.mxu0 %v40
    %v151 = vpop.f32.mrf.mxu0
    %v152 = vadd.f32 0.0, %v151
    %v153 = vpop.f32.mrf.mxu0
    %154 = vdwg.mxu0
    %155 = vmatprep.subr.mxu0 0.0
    %156 = vmatpush1.msra.mxu0 0.0
    %157 = vmatprep.subr.mxu0 0.0
    %158 = vmatpush1.msra.mxu0 0.0
    %159 = vmatprep.subr.mxu0 0.0
    %160 = vmatpush1.msra.mxu0 0.0
    %161 = vmatprep.subr.mxu0 0.0
    %162 = vmatpush1.msra.mxu0 0.0
    %163 = vmatprep.subr.mxu0 0.0
    %164 = vmatpush1.msra.mxu0 0.0
    %165 = vmatprep.subr.mxu0 0.0
    %166 = vmatpush1.msra.mxu0 0.0
    %167 = vmatprep.subr.mxu0 0.0
    %168 = vmatpush1.msra.mxu0 0.0
    %169 = vmatprep.subr.mxu0 0.0
    %170 = vmatpush1.msra.mxu0 0.0
    %171 = vmatprep.subr.mxu0 0.0
    %172 = vmatpush1.msra.mxu0 0.0
    %173 = vmatprep.subr.mxu0 0.0
    %174 = vmatpush1.msra.mxu0 0.0
    %175 = vmatprep.subr.mxu0 0.0
    %176 = vmatpush1.msra.mxu0 0.0
    %177 = vmatprep.subr.mxu0 0.0
    %178 = vmatpush1.msra.mxu0 0.0
    %179 = vmatprep.subr.mxu0 0.0
    %180 = vmatpush1.msra.mxu0 %v77
    %181 = vmatprep.subr.mxu0 0.0
    %182 = vmatpush1.msra.mxu0 %v76
    %183 = vmatprep.subr.mxu0 0.0
    %184 = vmatpush1.msra.mxu0 %v75
    %185 = vmatprep.subr.mxu0 0.0
    %186 = vmatpush1.msra.mxu0 %v74
    %187 = vmatprep.subr.mxu0 0.0
    %188 = vmatpush2.msra.mxu0 0.0
    %189 = vmatprep.subr.mxu0 0.0
    %190 = vmatpush2.msra.mxu0 0.0
    %191 = vmatprep.subr.mxu0 0.0
    %192 = vmatpush2.msra.mxu0 0.0
    %193 = vmatprep.subr.mxu0 0.0
    %194 = vmatpush2.msra.mxu0 0.0
    %195 = vmatprep.subr.mxu0 0.0
    %196 = vmatpush2.msra.mxu0 0.0
    %197 = vmatprep.subr.mxu0 0.0
    %198 = vmatpush2.msra.mxu0 0.0
    %199 = vmatprep.subr.mxu0 0.0
    %200 = vmatpush2.msra.mxu0 0.0
    %201 = vmatprep.subr.mxu0 0.0
    %202 = vmatpush2.msra.mxu0 0.0
    %203 = vmatprep.subr.mxu0 0.0
    %204 = vmatpush2.msra.mxu0 0.0
    %205 = vmatprep.subr.mxu0 0.0
    %206 = vmatpush2.msra.mxu0 0.0
    %207 = vmatprep.subr.mxu0 0.0
    %208 = vmatpush2.msra.mxu0 0.0
    %209 = vmatprep.subr.mxu0 0.0
    %210 = vmatpush2.msra.mxu0 0.0
    %211 = vmatprep.subr.mxu0 0.0
    %212 = vmatpush2.msra.mxu0 0.0
    %213 = vmatprep.subr.mxu0 0.0
    %214 = vmatpush2.msra.mxu0 0.0
    %215 = vmatprep.subr.mxu0 0.0
    %216 = vmatpush2.msra.mxu0 0.0
    %217 = vmatprep.subr.mxu0 0.0
    %218 = vmatpush2.msra.mxu0 0.0
    %219 = vmatprep.mubr.f32.mxu0 0.0
    %220 = vmatmul.mubr.f32.gmra.mxu0 %v83
    %v221 = vpop.f32.mrf.mxu0
    %v222 = vadd.f32 %v152, %v221
    %v223 = vpop.f32.mrf.mxu0
    %224 = vdwg.mxu0
    %v225 = vrsqrt.pop %v222
    %v226 = vmul.f32 %v222, %v225
    %vm227 = vcmp.eq.f32.partialorder %v222, inf
    %v228 = vsel %vm227, %v222, %v226
    %vm229 = vcmp.eq.f32.partialorder %v222, 0.0
    %v230 = vand.u32 %v222, 2147483648
    %v231 = vsel %vm229, %v230, %v228
    %vm232 = vcmask 781312
    %233 = vst.msk [vmem:[#allocation7] sm:$0xf] %vm232, %v231
    // Predicated region
    $region18: #{tpu_custom_call.1} parent=1 // pred_check
      _
    $region19: #{tpu_custom_call.1} parent=1 // pred_check_branch
      %235 = sbr.rel (0) target = $region21
    $region20: #{tpu_custom_call.1} parent=1 // pred_region
      %s237 = ssub.s32 64, 64
      %238 = vsyncadd [#allocation4], %s237
      %s240 = sshll.u32 [#allocation7], 4
      %s241 = int_to_ptr.vmem [resolvable:$true] %s240
      %243 = dma.vmem_to_hbm [thread:$0]  %s241, 64, %s2, [#allocation4]
    $region21: #{tpu_custom_call.1} parent=1 // pred_fallthru
      _
    // Predicated region
    $region22: #{tpu_custom_call.1} parent=1 // pred_check
      _
    $region23: #{tpu_custom_call.1} parent=1 // pred_check_branch
      %245 = sbr.rel (0) target = $region25
    $region24: #{tpu_custom_call.1} parent=1 // pred_region
      %246 = dma.done [#allocation4], 64
    $region25: #{tpu_custom_call.1} parent=1 // pred_fallthru
      _
    %247 = vsyncpa [#allocation3], 1
    %248 = vsyncpa [#allocation6], 1
    %249 = vsyncpa [#allocation4], 1

</llo_original>
